<compile_context>
chip_gen: v5e
topology: v5e:2x2
jax: 0.10.0
libtpu: 0.0.40
codegen_flags: <defaults>
</compile_context>

<pallas_src>
import functools

import jax
import jax.numpy as jnp
from jax.experimental import pallas as pl
from jax.experimental.pallas import tpu as pltpu


def _round_up(x, m):
    return (x + m - 1) // m * m


def _mlp_vae_kernel(h_ref, eps_ref,
                    w11_ref, b11_ref,
                    w12_ref, b12_ref,
                    wd1h_ref, wd1z_ref, bd1_ref,
                    wd2_ref, bd2_ref,
                    out_ref, *, pad):
    h = h_ref[...]        # (TM, Hs)
    eps = eps_ref[...]    # (TM, E)

    # ---- encoder ----
    z_mu = jnp.dot(h, w11_ref[...], preferred_element_type=jnp.float32) + b11_ref[...]
    z_lsgms = jnp.dot(h, w12_ref[...], preferred_element_type=jnp.float32) + b12_ref[...]

    # ---- reparameterization (exp goes to the EUP slot) ----
    z_sgm = jnp.exp(0.5 * z_lsgms)
    z = eps * z_sgm + z_mu

    # ---- decoder: decode_1(cat(h, z)) == h @ Wd1_h + z @ Wd1_z + bd1 ----
    y1 = (jnp.dot(h, wd1h_ref[...], preferred_element_type=jnp.float32)
          + jnp.dot(z, wd1z_ref[...], preferred_element_type=jnp.float32)
          + bd1_ref[...])
    y1 = jnp.maximum(y1, 0.0)
    y = jnp.dot(y1, wd2_ref[...], preferred_element_type=jnp.float32) + bd2_ref[...]

    # ---- lane-dense packed store: [z_mu | z_lsgms | y | zero-pad] ----
    pieces = [z_mu, z_lsgms, y]
    if pad > 0:
        pieces.append(jnp.zeros((h.shape[0], pad), jnp.float32))
    out_ref[...] = jnp.concatenate(pieces, axis=-1).astype(out_ref.dtype)


def mlp_vae_conditional_forward(h, eps, params):
    """h: (B, S, h_size), eps: (B, S, E) standard-normal noise.
    Returns (y, z_mu, z_lsgms) with the same semantics as the torch module."""
    B, S, Hs = h.shape
    w11, b11 = params["w11"], params["b11"]
    w12, b12 = params["w12"], params["b12"]
    wd1h, wd1z, bd1 = params["wd1h"], params["wd1z"], params["bd1"]
    wd2, bd2 = params["wd2"], params["bd2"]
    E = w11.shape[1]
    Y = wd2.shape[1]
    assert eps.shape == (B, S, E)

    M = B * S
    h2 = h.reshape(M, Hs)
    eps2 = eps.reshape(M, E)

    # Row tile: multiple of 8 sublanes, capped so per-step blocks stay tiny in VMEM.
    TM = min(_round_up(M, 8), 512)
    M_pad = _round_up(M, TM)
    if M_pad != M:
        h2 = jnp.pad(h2, ((0, M_pad - M), (0, 0)))
        eps2 = jnp.pad(eps2, ((0, M_pad - M), (0, 0)))

    W_packed = _round_up(2 * E + Y, 128)   # lane-dense packed output width
    pad = W_packed - (2 * E + Y)

    kernel = functools.partial(_mlp_vae_kernel, pad=pad)

    packed = pl.pallas_call(
        kernel,
        out_shape=jax.ShapeDtypeStruct((M_pad, W_packed), h.dtype),
        grid=(M_pad // TM,),
        in_specs=[
            pl.BlockSpec((TM, Hs), lambda i: (i, 0)),   # h rows
            pl.BlockSpec((TM, E), lambda i: (i, 0)),    # eps rows
            pl.BlockSpec((Hs, E), lambda i: (0, 0)),    # W11 (resident)
            pl.BlockSpec((1, E), lambda i: (0, 0)),     # b11
            pl.BlockSpec((Hs, E), lambda i: (0, 0)),    # W12
            pl.BlockSpec((1, E), lambda i: (0, 0)),     # b12
            pl.BlockSpec((Hs, E), lambda i: (0, 0)),    # Wd1 rows that multiply h
            pl.BlockSpec((E, E), lambda i: (0, 0)),     # Wd1 rows that multiply z
            pl.BlockSpec((1, E), lambda i: (0, 0)),     # bd1
            pl.BlockSpec((E, Y), lambda i: (0, 0)),     # Wd2
            pl.BlockSpec((1, Y), lambda i: (0, 0)),     # bd2
        ],
        out_specs=pl.BlockSpec((TM, W_packed), lambda i: (i, 0)),
        compiler_params=pltpu.CompilerParams(
            dimension_semantics=("parallel",),
            vmem_limit_bytes=32 * 1024 * 1024,
        ),
    )(h2, eps2, w11, b11, w12, b12, wd1h, wd1z, bd1, wd2, bd2)

    packed = packed[:M]
    z_mu = packed[:, 0:E].reshape(B, S, E)
    z_lsgms = packed[:, E:2 * E].reshape(B, S, E)
    y = packed[:, 2 * E:2 * E + Y].reshape(B, S, Y)
    return y, z_mu, z_lsgms


# ----------------------------- parameter init ------------------------------

def _xavier_uniform(key, fan_in, fan_out, gain):
    # matches torch.nn.init.xavier_uniform with gain=calculate_gain('relu')
    bound = gain * (6.0 / (fan_in + fan_out)) ** 0.5
    return jax.random.uniform(key, (fan_in, fan_out), jnp.float32, -bound, bound)


def _linear_bias(key, fan_in, fan_out):
    # torch nn.Linear default bias init: U(-1/sqrt(fan_in), 1/sqrt(fan_in))
    bound = 1.0 / (fan_in ** 0.5)
    return jax.random.uniform(key, (1, fan_out), jnp.float32, -bound, bound)


def init_params(key, h_size, embedding_size, y_size):
    gain = 2.0 ** 0.5   # nn.init.calculate_gain('relu')
    ks = jax.random.split(key, 8)
    w11 = _xavier_uniform(ks[0], h_size, embedding_size, gain)
    b11 = _linear_bias(ks[1], h_size, embedding_size)
    w12 = _xavier_uniform(ks[2], h_size, embedding_size, gain)
    b12 = _linear_bias(ks[3], h_size, embedding_size)
    wd1 = _xavier_uniform(ks[4], embedding_size + h_size, embedding_size, gain)
    bd1 = _linear_bias(ks[5], embedding_size + h_size, embedding_size)
    wd2 = _xavier_uniform(ks[6], embedding_size, y_size, gain)
    bd2 = _linear_bias(ks[7], embedding_size, y_size)
    # torch cat((h, z), dim=2): first h_size input columns multiply h, rest multiply z.
    return dict(w11=w11, b11=b11, w12=w12, b12=b12,
                wd1h=wd1[:h_size], wd1z=wd1[h_size:], bd1=bd1,
                wd2=wd2, bd2=bd2)


def reference_forward(h, eps, p):
    z_mu = jnp.einsum("bsh,he->bse", h, p["w11"]) + p["b11"][0]
    z_lsgms = jnp.einsum("bsh,he->bse", h, p["w12"]) + p["b12"][0]
    z = eps * jnp.exp(0.5 * z_lsgms) + z_mu
    wd1 = jnp.concatenate([p["wd1h"], p["wd1z"]], axis=0)
    hz = jnp.concatenate([h, z], axis=-1)
    y1 = jnp.maximum(jnp.einsum("bsc,ce->bse", hz, wd1) + p["bd1"][0], 0.0)
    y = jnp.einsum("bse,ey->bsy", y1, p["wd2"]) + p["bd2"][0]
    return y, z_mu, z_lsgms


if __name__ == "__main__":
    # Small shapes consistent with the module: h is (batch, seq, h_size).
    B, S = 2, 8
    h_size, embedding_size, y_size = 32, 32, 16

    key = jax.random.PRNGKey(0)
    k_h, k_eps, k_par = jax.random.split(key, 3)

    h = jax.random.normal(k_h, (B, S, h_size), jnp.float32)
    # eps (torch.randn in the module) is generated host-side for determinism
    # and passed into the kernel.
    eps = jax.random.normal(k_eps, (B, S, embedding_size), jnp.float32)
    params = init_params(k_par, h_size, embedding_size, y_size)

    y, z_mu, z_lsgms = mlp_vae_conditional_forward(h, eps, params)
    (y, z_mu, z_lsgms) = jax.block_until_ready((y, z_mu, z_lsgms))

    y_ref, z_mu_ref, z_lsgms_ref = reference_forward(h, eps, params)
    for name, got, want in [("y", y, y_ref),
                            ("z_mu", z_mu, z_mu_ref),
                            ("z_lsgms", z_lsgms, z_lsgms_ref)]:
        assert got.shape == want.shape, f"shape mismatch in {name}"
        assert jnp.allclose(got, want, atol=1e-3, rtol=1e-3), f"mismatch in {name}"

    print("KERNEL_OK")
</pallas_src>

<mosaic_0001>
module attributes {stable_mosaic.version = 11 : i64} {
  func.func @_mlp_vae_kernel(%arg0: i32, %arg1: memref<16x32xf32, #tpu.memory_space<vmem>>, %arg2: memref<16x32xf32, #tpu.memory_space<vmem>>, %arg3: memref<32x32xf32, #tpu.memory_space<vmem>>, %arg4: memref<1x32xf32, #tpu.memory_space<vmem>>, %arg5: memref<32x32xf32, #tpu.memory_space<vmem>>, %arg6: memref<1x32xf32, #tpu.memory_space<vmem>>, %arg7: memref<32x32xf32, #tpu.memory_space<vmem>>, %arg8: memref<32x32xf32, #tpu.memory_space<vmem>>, %arg9: memref<1x32xf32, #tpu.memory_space<vmem>>, %arg10: memref<32x16xf32, #tpu.memory_space<vmem>>, %arg11: memref<1x16xf32, #tpu.memory_space<vmem>>, %arg12: memref<16x128xf32, #tpu.memory_space<vmem>>) attributes {dimension_semantics = [#tpu.dimension_semantics<parallel>], iteration_bounds = array<i64: 1>, scalar_prefetch = 0 : i64, scratch_operands = 0 : i64, tpu.core_type = #tpu.core_type<tc>, window_params = [{transform_indices = @transform_0, window_bounds = array<i64: 16, 32>}, {transform_indices = @transform_1, window_bounds = array<i64: 16, 32>}, {pipeline_mode = #tpu.pipeline_mode<synchronous>, transform_indices = @transform_2, window_bounds = array<i64: 32, 32>}, {pipeline_mode = #tpu.pipeline_mode<synchronous>, transform_indices = @transform_3, window_bounds = array<i64: 1, 32>}, {pipeline_mode = #tpu.pipeline_mode<synchronous>, transform_indices = @transform_4, window_bounds = array<i64: 32, 32>}, {pipeline_mode = #tpu.pipeline_mode<synchronous>, transform_indices = @transform_5, window_bounds = array<i64: 1, 32>}, {pipeline_mode = #tpu.pipeline_mode<synchronous>, transform_indices = @transform_6, window_bounds = array<i64: 32, 32>}, {pipeline_mode = #tpu.pipeline_mode<synchronous>, transform_indices = @transform_7, window_bounds = array<i64: 32, 32>}, {pipeline_mode = #tpu.pipeline_mode<synchronous>, transform_indices = @transform_8, window_bounds = array<i64: 1, 32>}, {pipeline_mode = #tpu.pipeline_mode<synchronous>, transform_indices = @transform_9, window_bounds = array<i64: 32, 16>}, {pipeline_mode = #tpu.pipeline_mode<synchronous>, transform_indices = @transform_10, window_bounds = array<i64: 1, 16>}, {transform_indices = @transform_11, window_bounds = array<i64: 16, 128>}]} {
    %c0 = arith.constant 0 : index
    %c0_0 = arith.constant 0 : index
    %0 = vector.load %arg1[%c0, %c0_0] : memref<16x32xf32, #tpu.memory_space<vmem>>, vector<16x32xf32>
    %c0_1 = arith.constant 0 : index
    %c0_2 = arith.constant 0 : index
    %1 = vector.load %arg2[%c0_1, %c0_2] : memref<16x32xf32, #tpu.memory_space<vmem>>, vector<16x32xf32>
    %c0_3 = arith.constant 0 : index
    %c0_4 = arith.constant 0 : index
    %2 = vector.load %arg3[%c0_3, %c0_4] : memref<32x32xf32, #tpu.memory_space<vmem>>, vector<32x32xf32>
    %cst = arith.constant dense<0.000000e+00> : vector<16x32xf32>
    %3 = tpu.matmul %0, %2, %cst {dimension_numbers = #tpu.dot_dimension_numbers<[1], [0], [0], [1], [0, 0, 1, 1], [], []>} : vector<16x32xf32>, vector<32x32xf32>, vector<16x32xf32> -> vector<16x32xf32>
    %c0_5 = arith.constant 0 : index
    %c0_6 = arith.constant 0 : index
    %4 = vector.load %arg4[%c0_5, %c0_6] : memref<1x32xf32, #tpu.memory_space<vmem>>, vector<1x32xf32>
    %5 = vector.broadcast %4 : vector<1x32xf32> to vector<16x32xf32>
    %6 = arith.addf %3, %5 : vector<16x32xf32>
    %c0_7 = arith.constant 0 : index
    %c0_8 = arith.constant 0 : index
    %7 = vector.load %arg5[%c0_7, %c0_8] : memref<32x32xf32, #tpu.memory_space<vmem>>, vector<32x32xf32>
    %cst_9 = arith.constant dense<0.000000e+00> : vector<16x32xf32>
    %8 = tpu.matmul %0, %7, %cst_9 {dimension_numbers = #tpu.dot_dimension_numbers<[1], [0], [0], [1], [0, 0, 1, 1], [], []>} : vector<16x32xf32>, vector<32x32xf32>, vector<16x32xf32> -> vector<16x32xf32>
    %c0_10 = arith.constant 0 : index
    %c0_11 = arith.constant 0 : index
    %9 = vector.load %arg6[%c0_10, %c0_11] : memref<1x32xf32, #tpu.memory_space<vmem>>, vector<1x32xf32>
    %10 = vector.broadcast %9 : vector<1x32xf32> to vector<16x32xf32>
    %11 = arith.addf %8, %10 : vector<16x32xf32>
    %cst_12 = arith.constant 5.000000e-01 : f32
    %12 = vector.broadcast %cst_12 : f32 to vector<16x32xf32>
    %13 = arith.mulf %12, %11 : vector<16x32xf32>
    %14 = math.exp %13 : vector<16x32xf32>
    %15 = arith.mulf %1, %14 : vector<16x32xf32>
    %16 = arith.addf %15, %6 : vector<16x32xf32>
    %c0_13 = arith.constant 0 : index
    %c0_14 = arith.constant 0 : index
    %17 = vector.load %arg7[%c0_13, %c0_14] : memref<32x32xf32, #tpu.memory_space<vmem>>, vector<32x32xf32>
    %cst_15 = arith.constant dense<0.000000e+00> : vector<16x32xf32>
    %18 = tpu.matmul %0, %17, %cst_15 {dimension_numbers = #tpu.dot_dimension_numbers<[1], [0], [0], [1], [0, 0, 1, 1], [], []>} : vector<16x32xf32>, vector<32x32xf32>, vector<16x32xf32> -> vector<16x32xf32>
    %c0_16 = arith.constant 0 : index
    %c0_17 = arith.constant 0 : index
    %19 = vector.load %arg8[%c0_16, %c0_17] : memref<32x32xf32, #tpu.memory_space<vmem>>, vector<32x32xf32>
    %cst_18 = arith.constant dense<0.000000e+00> : vector<16x32xf32>
    %20 = tpu.matmul %16, %19, %cst_18 {dimension_numbers = #tpu.dot_dimension_numbers<[1], [0], [0], [1], [0, 0, 1, 1], [], []>} : vector<16x32xf32>, vector<32x32xf32>, vector<16x32xf32> -> vector<16x32xf32>
    %21 = arith.addf %18, %20 : vector<16x32xf32>
    %c0_19 = arith.constant 0 : index
    %c0_20 = arith.constant 0 : index
    %22 = vector.load %arg9[%c0_19, %c0_20] : memref<1x32xf32, #tpu.memory_space<vmem>>, vector<1x32xf32>
    %23 = vector.broadcast %22 : vector<1x32xf32> to vector<16x32xf32>
    %24 = arith.addf %21, %23 : vector<16x32xf32>
    %cst_21 = arith.constant 0.000000e+00 : f32
    %25 = vector.broadcast %cst_21 : f32 to vector<16x32xf32>
    %26 = arith.maximumf %24, %25 : vector<16x32xf32>
    %c0_22 = arith.constant 0 : index
    %c0_23 = arith.constant 0 : index
    %27 = vector.load %arg10[%c0_22, %c0_23] : memref<32x16xf32, #tpu.memory_space<vmem>>, vector<32x16xf32>
    %cst_24 = arith.constant dense<0.000000e+00> : vector<16x16xf32>
    %28 = tpu.matmul %26, %27, %cst_24 {dimension_numbers = #tpu.dot_dimension_numbers<[1], [0], [0], [1], [0, 0, 1, 1], [], []>} : vector<16x32xf32>, vector<32x16xf32>, vector<16x16xf32> -> vector<16x16xf32>
    %c0_25 = arith.constant 0 : index
    %c0_26 = arith.constant 0 : index
    %29 = vector.load %arg11[%c0_25, %c0_26] : memref<1x16xf32, #tpu.memory_space<vmem>>, vector<1x16xf32>
    %30 = vector.broadcast %29 : vector<1x16xf32> to vector<16x16xf32>
    %31 = arith.addf %28, %30 : vector<16x16xf32>
    %cst_27 = arith.constant 0.000000e+00 : f32
    %32 = vector.broadcast %cst_27 : f32 to vector<16x48xf32>
    %33 = tpu.concatenate %6, %11, %31, %32 in 1 : vector<16x32xf32>, vector<16x32xf32>, vector<16x16xf32>, vector<16x48xf32> -> vector<16x128xf32>
    %c0_28 = arith.constant 0 : index
    %c0_29 = arith.constant 0 : index
    %34 = vector.load %arg12[%c0_28, %c0_29] : memref<16x128xf32, #tpu.memory_space<vmem>>, vector<16x128xf32>
    tpu.vector_store %arg12[%c0_28, %c0_29], %33 {strides = array<i32>} : memref<16x128xf32, #tpu.memory_space<vmem>>, vector<16x128xf32>,
    return
  }
  func.func @transform_0(%arg0: i32) -> (i32, i32) {
    %c0_i32 = arith.constant 0 : i32
    %c0_i32_0 = arith.constant 0 : i32
    return %arg0, %c0_i32 : i32, i32
  }
  func.func @transform_1(%arg0: i32) -> (i32, i32) {
    %c0_i32 = arith.constant 0 : i32
    %c0_i32_0 = arith.constant 0 : i32
    return %arg0, %c0_i32 : i32, i32
  }
  func.func @transform_2(%arg0: i32) -> (i32, i32) {
    %c0_i32 = arith.constant 0 : i32
    %c0_i32_0 = arith.constant 0 : i32
    %c0_i32_1 = arith.constant 0 : i32
    return %c0_i32, %c0_i32_0 : i32, i32
  }
  func.func @transform_3(%arg0: i32) -> (i32, i32) {
    %c0_i32 = arith.constant 0 : i32
    %c0_i32_0 = arith.constant 0 : i32
    %c0_i32_1 = arith.constant 0 : i32
    return %c0_i32, %c0_i32_0 : i32, i32
  }
  func.func @transform_4(%arg0: i32) -> (i32, i32) {
    %c0_i32 = arith.constant 0 : i32
    %c0_i32_0 = arith.constant 0 : i32
    %c0_i32_1 = arith.constant 0 : i32
    return %c0_i32, %c0_i32_0 : i32, i32
  }
  func.func @transform_5(%arg0: i32) -> (i32, i32) {
    %c0_i32 = arith.constant 0 : i32
    %c0_i32_0 = arith.constant 0 : i32
    %c0_i32_1 = arith.constant 0 : i32
    return %c0_i32, %c0_i32_0 : i32, i32
  }
  func.func @transform_6(%arg0: i32) -> (i32, i32) {
    %c0_i32 = arith.constant 0 : i32
    %c0_i32_0 = arith.constant 0 : i32
    %c0_i32_1 = arith.constant 0 : i32
    return %c0_i32, %c0_i32_0 : i32, i32
  }
  func.func @transform_7(%arg0: i32) -> (i32, i32) {
    %c0_i32 = arith.constant 0 : i32
    %c0_i32_0 = arith.constant 0 : i32
    %c0_i32_1 = arith.constant 0 : i32
    return %c0_i32, %c0_i32_0 : i32, i32
  }
  func.func @transform_8(%arg0: i32) -> (i32, i32) {
    %c0_i32 = arith.constant 0 : i32
    %c0_i32_0 = arith.constant 0 : i32
    %c0_i32_1 = arith.constant 0 : i32
    return %c0_i32, %c0_i32_0 : i32, i32
  }
  func.func @transform_9(%arg0: i32) -> (i32, i32) {
    %c0_i32 = arith.constant 0 : i32
    %c0_i32_0 = arith.constant 0 : i32
    %c0_i32_1 = arith.constant 0 : i32
    return %c0_i32, %c0_i32_0 : i32, i32
  }
  func.func @transform_10(%arg0: i32) -> (i32, i32) {
    %c0_i32 = arith.constant 0 : i32
    %c0_i32_0 = arith.constant 0 : i32
    %c0_i32_1 = arith.constant 0 : i32
    return %c0_i32, %c0_i32_0 : i32, i32
  }
  func.func @transform_11(%arg0: i32) -> (i32, i32) {
    %c0_i32 = arith.constant 0 : i32
    %c0_i32_0 = arith.constant 0 : i32
    return %arg0, %c0_i32 : i32, i32
  }
}

</mosaic_0001>

<llo_original>
// kernel: tpu_custom_call.1
$region0: #{tpu_custom_call.1}
  #allocation0 [shape = 'u32[]', space=smem, size = 0x4, offset = 0x4, fixed_abs, tag = 'smem constant byte address 0x4 - core index']
  #allocation1 [shape = 'u32[72,128]{1,0:T(1,128)}', space=vmem, size = 0x9000, scoped, tag = 'internal scratch']
  %s0 = inlined_call_operand.vmem [shape: f32[16,32], index: 0, kind: input, shape index: {}]
  %s1 = inlined_call_operand.hbm [shape: f32[16,32], index: 1, kind: input, shape index: {}]
  %s2 = inlined_call_operand.vmem [shape: f32[32,32], index: 2, kind: input, shape index: {}]
  %s3 = inlined_call_operand.vmem [shape: f32[1,32], index: 3, kind: input, shape index: {}]
  %s4 = inlined_call_operand.hbm [shape: f32[32,32], index: 4, kind: input, shape index: {}]
  %s5 = inlined_call_operand.vmem [shape: f32[1,32], index: 5, kind: input, shape index: {}]
  %s6 = inlined_call_operand.hbm [shape: f32[32,32], index: 6, kind: input, shape index: {}]
  %s7 = inlined_call_operand.hbm [shape: f32[32,32], index: 7, kind: input, shape index: {}]
  %s8 = inlined_call_operand.vmem [shape: f32[1,32], index: 8, kind: input, shape index: {}]
  %s9 = inlined_call_operand.vmem [shape: f32[32,16], index: 9, kind: input, shape index: {}]
  %s10 = inlined_call_operand.vmem [shape: f32[1,16], index: 10, kind: input, shape index: {}]
  %s11 = inlined_call_operand.hbm [shape: f32[16,128], index: 11, kind: output, shape index: {}]
  %s12 = sld [smem:[#allocation0]]
  $region70: #{tpu_custom_call.1} parent=0
    _
  %s14 = ssub.s32 1, %s12
  %s15 = scalar_select 0, %s14, %s12
  $region1: #{tpu_custom_call.1} parent=0
    #allocation2 [shape = 'u8[8192]{0}', space=vmem, size = 0x2000, scoped, tag = 'input window, operand 1, single buffered']
    #allocation3 [shape = 's32[1]{0}', space=sflag, size = 0x4, scoped, tag = 'scoped memory for tpu_custom_call.1']
    #allocation4 [shape = 's32[1]{0}', space=sflag, size = 0x4, scoped, tag = 'scoped memory for tpu_custom_call.1']
    #allocation5 [shape = 'u8[16384]{0}', space=vmem, size = 0x4000, scoped, tag = 'input window, operand 4, single buffered']
    #allocation6 [shape = 's32[1]{0}', space=sflag, size = 0x4, scoped, tag = 'scoped memory for tpu_custom_call.1']
    #allocation7 [shape = 'u8[16384]{0}', space=vmem, size = 0x4000, scoped, tag = 'input window, operand 6, single buffered']
    #allocation8 [shape = 'u8[16384]{0}', space=vmem, size = 0x4000, scoped, tag = 'input window, operand 7, single buffered']
    #allocation9 [shape = 's32[1]{0}', space=sflag, size = 0x4, scoped, tag = 'scoped memory for tpu_custom_call.1']
    #allocation10 [shape = 'u8[8192]{0}', space=vmem, size = 0x2000, scoped, tag = 'output window, operand 0, single buffered']
    %16 = vsyncpa [#allocation3], 0
    %17 = vsyncpa [#allocation6], 0
    %18 = vsyncpa [#allocation9], 0
    %19 = vsyncpa [#allocation4], 0
    // Predicated region
    $region2: #{tpu_custom_call.1} parent=1 // pred_check
      _
    $region3: #{tpu_custom_call.1} parent=1 // pred_check_branch
      %21 = sbr.rel (0) target = $region5
    $region4: #{tpu_custom_call.1} parent=1 // pred_region
      _
    $region5: #{tpu_custom_call.1} parent=1 // pred_fallthru
      _
    // Predicated region
    $region6: #{tpu_custom_call.1} parent=1 // pred_check
      _
    $region7: #{tpu_custom_call.1} parent=1 // pred_check_branch
      %23 = sbr.rel (0) target = $region9
    $region8: #{tpu_custom_call.1} parent=1 // pred_region
      %25 = vsyncadd [#allocation3], 0
      %s26 = sshll.u32 %s1, 4
      %s27 = int_to_ptr.hbm [resolvable:$true] %s26
      %s28 = sshll.u32 [#allocation2], 4
      %s29 = int_to_ptr.vmem [resolvable:$true] %s28
      %34 = dma.hbm_to_vmem [thread:$0]  %s27, 256, %s29, [#allocation3], 128, 128, 8
    $region9: #{tpu_custom_call.1} parent=1 // pred_fallthru
      _
    // Predicated region
    $region10: #{tpu_custom_call.1} parent=1 // pred_check
      _
    $region11: #{tpu_custom_call.1} parent=1 // pred_check_branch
      %36 = sbr.rel (0) target = $region13
    $region12: #{tpu_custom_call.1} parent=1 // pred_region
      _
    $region13: #{tpu_custom_call.1} parent=1 // pred_fallthru
      _
    // Predicated region
    $region14: #{tpu_custom_call.1} parent=1 // pred_check
      _
    $region15: #{tpu_custom_call.1} parent=1 // pred_check_branch
      %38 = sbr.rel (0) target = $region17
    $region16: #{tpu_custom_call.1} parent=1 // pred_region
      _
    $region17: #{tpu_custom_call.1} parent=1 // pred_fallthru
      _
    // Predicated region
    $region18: #{tpu_custom_call.1} parent=1 // pred_check
      _
    $region19: #{tpu_custom_call.1} parent=1 // pred_check_branch
      %40 = sbr.rel (0) target = $region21
    $region20: #{tpu_custom_call.1} parent=1 // pred_region
      %42 = vsyncadd [#allocation6], 0
      %s43 = sshll.u32 %s4, 4
      %s44 = int_to_ptr.hbm [resolvable:$true] %s43
      %s45 = sshll.u32 [#allocation5], 4
      %s46 = int_to_ptr.vmem [resolvable:$true] %s45
      %51 = dma.hbm_to_vmem [thread:$0]  %s44, 512, %s46, [#allocation6], 128, 128, 8
    $region21: #{tpu_custom_call.1} parent=1 // pred_fallthru
      _
    // Predicated region
    $region22: #{tpu_custom_call.1} parent=1 // pred_check
      _
    $region23: #{tpu_custom_call.1} parent=1 // pred_check_branch
      %53 = sbr.rel (0) target = $region25
    $region24: #{tpu_custom_call.1} parent=1 // pred_region
      _
    $region25: #{tpu_custom_call.1} parent=1 // pred_fallthru
      _
    // Predicated region
    $region26: #{tpu_custom_call.1} parent=1 // pred_check
      _
    $region27: #{tpu_custom_call.1} parent=1 // pred_check_branch
      %55 = sbr.rel (0) target = $region29
    $region28: #{tpu_custom_call.1} parent=1 // pred_region
      %57 = vsyncadd [#allocation6], 0
      %s58 = sshll.u32 %s6, 4
      %s59 = int_to_ptr.hbm [resolvable:$true] %s58
      %s60 = sshll.u32 [#allocation7], 4
      %s61 = int_to_ptr.vmem [resolvable:$true] %s60
      %66 = dma.hbm_to_vmem [thread:$0]  %s59, 512, %s61, [#allocation6], 128, 128, 8
    $region29: #{tpu_custom_call.1} parent=1 // pred_fallthru
      _
    // Predicated region
    $region30: #{tpu_custom_call.1} parent=1 // pred_check
      _
    $region31: #{tpu_custom_call.1} parent=1 // pred_check_branch
      %68 = sbr.rel (0) target = $region33
    $region32: #{tpu_custom_call.1} parent=1 // pred_region
      %70 = vsyncadd [#allocation9], 0
      %s71 = sshll.u32 %s7, 4
      %s72 = int_to_ptr.hbm [resolvable:$true] %s71
      %s73 = sshll.u32 [#allocation8], 4
      %s74 = int_to_ptr.vmem [resolvable:$true] %s73
      %79 = dma.hbm_to_vmem [thread:$0]  %s72, 512, %s74, [#allocation9], 128, 128, 8
    $region33: #{tpu_custom_call.1} parent=1 // pred_fallthru
      _
    // Predicated region
    $region34: #{tpu_custom_call.1} parent=1 // pred_check
      _
    $region35: #{tpu_custom_call.1} parent=1 // pred_check_branch
      %81 = sbr.rel (0) target = $region37
    $region36: #{tpu_custom_call.1} parent=1 // pred_region
      _
    $region37: #{tpu_custom_call.1} parent=1 // pred_fallthru
      _
    // Predicated region
    $region38: #{tpu_custom_call.1} parent=1 // pred_check
      _
    $region39: #{tpu_custom_call.1} parent=1 // pred_check_branch
      %83 = sbr.rel (0) target = $region41
    $region40: #{tpu_custom_call.1} parent=1 // pred_region
      _
    $region41: #{tpu_custom_call.1} parent=1 // pred_fallthru
      _
    // Predicated region
    $region42: #{tpu_custom_call.1} parent=1 // pred_check
      _
    $region43: #{tpu_custom_call.1} parent=1 // pred_check_branch
      %85 = sbr.rel (0) target = $region45
    $region44: #{tpu_custom_call.1} parent=1 // pred_region
      _
    $region45: #{tpu_custom_call.1} parent=1 // pred_fallthru
      _
    // Predicated region
    $region46: #{tpu_custom_call.1} parent=1 // pred_check
      _
    $region47: #{tpu_custom_call.1} parent=1 // pred_check_branch
      %87 = sbr.rel (0) target = $region49
    $region48: #{tpu_custom_call.1} parent=1 // pred_region
      %89 = dma.done [#allocation3], 256
    $region49: #{tpu_custom_call.1} parent=1 // pred_fallthru
      _
    // Predicated region
    $region50: #{tpu_custom_call.1} parent=1 // pred_check
      _
    $region51: #{tpu_custom_call.1} parent=1 // pred_check_branch
      %91 = sbr.rel (0) target = $region53
    $region52: #{tpu_custom_call.1} parent=1 // pred_region
      %93 = dma.done [#allocation6], 512
    $region53: #{tpu_custom_call.1} parent=1 // pred_fallthru
      _
    // Predicated region
    $region54: #{tpu_custom_call.1} parent=1 // pred_check
      _
    $region55: #{tpu_custom_call.1} parent=1 // pred_check_branch
      %95 = sbr.rel (0) target = $region57
    $region56: #{tpu_custom_call.1} parent=1 // pred_region
      %97 = dma.done [#allocation6], 512
    $region57: #{tpu_custom_call.1} parent=1 // pred_fallthru
      _
    // Predicated region
    $region58: #{tpu_custom_call.1} parent=1 // pred_check
      _
    $region59: #{tpu_custom_call.1} parent=1 // pred_check_branch
      %99 = sbr.rel (0) target = $region61
    $region60: #{tpu_custom_call.1} parent=1 // pred_region
      %101 = dma.done [#allocation9], 512
    $region61: #{tpu_custom_call.1} parent=1 // pred_fallthru
      _
    %v102 = vld [vmem:[%s0] sm:$0xff]
    %v103 = vld [vmem:[%s0 + $0x8] sm:$0xff]
    %v104 = vld [vmem:[#allocation2] sm:$0xff]
    %v105 = vld [vmem:[#allocation2 + $0x8] sm:$0xff]
    %v106 = vld [vmem:[%s2] sm:$0xff]
    %v107 = vld [vmem:[%s2 + $0x8] sm:$0xff]
    %v108 = vld [vmem:[%s2 + $0x10] sm:$0xff]
    %v109 = vld [vmem:[%s2 + $0x18] sm:$0xff]
    %v110 = vld [vmem:[%s3] sm:$0x1]
    %v112 = vperm.slane %v110, 0
    %vm114 = vcmask 261120
    %v116 = vsel %vm114, %v102, 0
    %v119 = vsel %vm114, %v103, 0
    %121 = vmatpush.msra.mxu0 0.0
    %122 = vmatpush.msra.mxu0 0.0
    %123 = vmatpush.msra.mxu0 0.0
    %124 = vmatpush.msra.mxu0 0.0
    %125 = vmatpush.msra.mxu0 0.0
    %126 = vmatpush.msra.mxu0 0.0
    %127 = vmatpush.msra.mxu0 0.0
    %128 = vmatpush.msra.mxu0 0.0
    %129 = vmatpush.msra.mxu0 0.0
    %130 = vmatpush.msra.mxu0 0.0
    %131 = vmatpush.msra.mxu0 0.0
    %132 = vmatpush.msra.mxu0 0.0
    %133 = vmatpush.msra.mxu0 %v109
    %134 = vmatpush.msra.mxu0 %v108
    %135 = vmatpush.msra.mxu0 %v107
    %136 = vmatpush.msra.mxu0 %v106
    %137 = vmatmul.f32.gmra.mxu0 %v116
    %v138 = vpop.f32.mrf.mxu0
    %v139 = vadd.f32 %v112, %v138
    %140 = vmatmul.f32.gmra.mxu0 %v119
    %v141 = vpop.f32.mrf.mxu0
    %v142 = vadd.f32 %v112, %v141
    %143 = vdwg.mxu0
    %v144 = vld [vmem:[#allocation5] sm:$0xff]
    %v145 = vld [vmem:[#allocation5 + $0x8] sm:$0xff]
    %v146 = vld [vmem:[#allocation5 + $0x10] sm:$0xff]
    %v147 = vld [vmem:[#allocation5 + $0x18] sm:$0xff]
    %v148 = vld [vmem:[%s5] sm:$0x1]
    %v150 = vperm.slane %v148, 0
    %152 = vmatpush.msra.mxu0 0.0
    %153 = vmatpush.msra.mxu0 0.0
    %154 = vmatpush.msra.mxu0 0.0
    %155 = vmatpush.msra.mxu0 0.0
    %156 = vmatpush.msra.mxu0 0.0
    %157 = vmatpush.msra.mxu0 0.0
    %158 = vmatpush.msra.mxu0 0.0
    %159 = vmatpush.msra.mxu0 0.0
    %160 = vmatpush.msra.mxu0 0.0
    %161 = vmatpush.msra.mxu0 0.0
    %162 = vmatpush.msra.mxu0 0.0
    %163 = vmatpush.msra.mxu0 0.0
    %164 = vmatpush.msra.mxu0 %v147
    %165 = vmatpush.msra.mxu0 %v146
    %166 = vmatpush.msra.mxu0 %v145
    %167 = vmatpush.msra.mxu0 %v144
    %168 = vmatmul.f32.gmra.mxu0 %v116
    %v169 = vpop.f32.mrf.mxu0
    %v170 = vadd.f32 %v150, %v169
    %171 = vmatmul.f32.gmra.mxu0 %v119
    %v172 = vpop.f32.mrf.mxu0
    %v173 = vadd.f32 %v150, %v172
    %174 = vdwg.mxu0
    %v175 = vmul.f32 %v170, 0.5
    %v176 = vmul.f32 %v173, 0.5
    %v177 = vmul.f32 %v175, 1.442695
    %v178 = vpow.pop %v177
    %v179 = vmul.f32 %v176, 1.442695
    %v180 = vpow.pop %v179
    %v181 = vmul.f32 %v104, %v178
    %v182 = vmul.f32 %v105, %v180
    %v183 = vadd.f32 %v181, %v139
    %v184 = vadd.f32 %v182, %v142
    %v185 = vld [vmem:[#allocation7] sm:$0xff]
    %v186 = vld [vmem:[#allocation7 + $0x8] sm:$0xff]
    %v187 = vld [vmem:[#allocation7 + $0x10] sm:$0xff]
    %v188 = vld [vmem:[#allocation7 + $0x18] sm:$0xff]
    %v189 = vld [vmem:[#allocation8] sm:$0xff]
    %v190 = vld [vmem:[#allocation8 + $0x8] sm:$0xff]
    %v191 = vld [vmem:[#allocation8 + $0x10] sm:$0xff]
    %v192 = vld [vmem:[#allocation8 + $0x18] sm:$0xff]
    %v194 = vsel %vm114, %v183, 0
    %v197 = vsel %vm114, %v184, 0
    %199 = vmatpush.msra.mxu0 0.0
    %200 = vmatpush.msra.mxu0 0.0
    %201 = vmatpush.msra.mxu0 0.0
    %202 = vmatpush.msra.mxu0 0.0
    %203 = vmatpush.msra.mxu0 0.0
    %204 = vmatpush.msra.mxu0 0.0
    %205 = vmatpush.msra.mxu0 0.0
    %206 = vmatpush.msra.mxu0 0.0
    %207 = vmatpush.msra.mxu0 0.0
    %208 = vmatpush.msra.mxu0 0.0
    %209 = vmatpush.msra.mxu0 0.0
    %210 = vmatpush.msra.mxu0 0.0
    %211 = vmatpush.msra.mxu0 %v192
    %212 = vmatpush.msra.mxu0 %v191
    %213 = vmatpush.msra.mxu0 %v190
    %214 = vmatpush.msra.mxu0 %v189
    %215 = vmatmul.f32.gmra.mxu0 %v194
    %v216 = vpop.f32.mrf.mxu0
    %v217 = vadd.f32 0.0, %v216
    %218 = vmatmul.f32.gmra.mxu0 %v197
    %v219 = vpop.f32.mrf.mxu0
    %v220 = vadd.f32 0.0, %v219
    %221 = vdwg.mxu0
    %222 = vmatpush.msra.mxu0 0.0
    %223 = vmatpush.msra.mxu0 0.0
    %224 = vmatpush.msra.mxu0 0.0
    %225 = vmatpush.msra.mxu0 0.0
    %226 = vmatpush.msra.mxu0 0.0
    %227 = vmatpush.msra.mxu0 0.0
    %228 = vmatpush.msra.mxu0 0.0
    %229 = vmatpush.msra.mxu0 0.0
    %230 = vmatpush.msra.mxu0 0.0
    %231 = vmatpush.msra.mxu0 0.0
    %232 = vmatpush.msra.mxu0 0.0
    %233 = vmatpush.msra.mxu0 0.0
    %234 = vmatpush.msra.mxu0 %v188
    %235 = vmatpush.msra.mxu0 %v187
    %236 = vmatpush.msra.mxu0 %v186
    %237 = vmatpush.msra.mxu0 %v185
    %238 = vmatmul.f32.gmra.mxu0 %v116
    %v239 = vpop.f32.mrf.mxu0
    %v240 = vadd.f32 %v217, %v239
    %241 = vmatmul.f32.gmra.mxu0 %v119
    %v242 = vpop.f32.mrf.mxu0
    %v243 = vadd.f32 %v220, %v242
    %244 = vdwg.mxu0
    %v245 = vld [vmem:[%s8] sm:$0x1]
    %v247 = vperm.slane %v245, 0
    %v249 = vadd.f32 %v240, %v247
    %v250 = vadd.f32 %v243, %v247
    %v251 = vmax.f32 %v249, 0.0
    %v252 = vmax.f32 %v250, 0.0
    %v253 = vld [vmem:[%s9] sm:$0xff]
    %v254 = vld [vmem:[%s9 + $0x8] sm:$0xff]
    %v255 = vld [vmem:[%s9 + $0x10] sm:$0xff]
    %v256 = vld [vmem:[%s9 + $0x18] sm:$0xff]
    %v257 = vld [vmem:[%s10] sm:$0x1]
    %v259 = vperm.slane %v257, 0
    %v262 = vsel %vm114, %v251, 0
    %v265 = vsel %vm114, %v252, 0
    %267 = vmatpush.msra.mxu0 0.0
    %268 = vmatpush.msra.mxu0 0.0
    %269 = vmatpush.msra.mxu0 0.0
    %270 = vmatpush.msra.mxu0 0.0
    %271 = vmatpush.msra.mxu0 0.0
    %272 = vmatpush.msra.mxu0 0.0
    %273 = vmatpush.msra.mxu0 0.0
    %274 = vmatpush.msra.mxu0 0.0
    %275 = vmatpush.msra.mxu0 0.0
    %276 = vmatpush.msra.mxu0 0.0
    %277 = vmatpush.msra.mxu0 0.0
    %278 = vmatpush.msra.mxu0 0.0
    %279 = vmatpush.msra.mxu0 %v256
    %280 = vmatpush.msra.mxu0 %v255
    %281 = vmatpush.msra.mxu0 %v254
    %282 = vmatpush.msra.mxu0 %v253
    %283 = vmatmul.f32.gmra.mxu0 %v262
    %v284 = vpop.f32.mrf.mxu0
    %v285 = vadd.f32 %v259, %v284
    %286 = vmatmul.f32.gmra.mxu0 %v265
    %v287 = vpop.f32.mrf.mxu0
    %v288 = vadd.f32 %v259, %v287
    %289 = vdwg.mxu0
    %292 = vrot.lane.b32.xlu0 %v170, 32
    %v293 = vpop.permute.xlu0 %292
    %294 = vrot.lane.b32.xlu0 %v173, 32
    %v295 = vpop.permute.xlu0 %294
    %300 = vrot.lane.b32.xlu0 %v285, 64
    %v301 = vpop.permute.xlu0 %300
    %302 = vrot.lane.b32.xlu0 %v288, 64
    %v303 = vpop.permute.xlu0 %302
    %v306 = vsel %vm114, %v139, %v293
    %v307 = vsel %vm114, %v142, %v295
    %vm308 = vcmask 523264
    %v309 = vsel %vm308, %v306, %v301
    %v310 = vsel %vm308, %v307, %v303
    %vm311 = vcmask 654336
    %v312 = vsel %vm311, %v309, 0.0
    %v313 = vsel %vm311, %v310, 0.0
    %314 = vst [vmem:[#allocation10] sm:$0xff] %v312
    %315 = vst [vmem:[#allocation10 + $0x8] sm:$0xff] %v313
    // Predicated region
    $region62: #{tpu_custom_call.1} parent=1 // pred_check
      _
    $region63: #{tpu_custom_call.1} parent=1 // pred_check_branch
      %317 = sbr.rel (0) target = $region65
    $region64: #{tpu_custom_call.1} parent=1 // pred_region
      %319 = vsyncadd [#allocation4], 0
      %s320 = sshll.u32 [#allocation10], 4
      %s321 = int_to_ptr.vmem [resolvable:$true] %s320
      %s322 = sshll.u32 %s11, 4
      %s323 = int_to_ptr.hbm [resolvable:$true] %s322
      %328 = dma.vmem_to_hbm [thread:$0]  %s321, 256, %s323, [#allocation4], 128, 128, 8
    $region65: #{tpu_custom_call.1} parent=1 // pred_fallthru
      _
    // Predicated region
    $region66: #{tpu_custom_call.1} parent=1 // pred_check
      _
    $region67: #{tpu_custom_call.1} parent=1 // pred_check_branch
      %330 = sbr.rel (0) target = $region69
    $region68: #{tpu_custom_call.1} parent=1 // pred_region
      %332 = dma.done [#allocation4], 256
    $region69: #{tpu_custom_call.1} parent=1 // pred_fallthru
      _
    %333 = vsyncpa [#allocation3], 1
    %334 = vsyncpa [#allocation6], 1
    %335 = vsyncpa [#allocation9], 1
    %336 = vsyncpa [#allocation4], 1

</llo_original>
